<compile_context>
chip_gen: v5e
topology: v5e:2x2
jax: 0.10.0
libtpu: 0.0.40
codegen_flags: <defaults>
</compile_context>

<pallas_src>
import jax
import jax.numpy as jnp
from jax.experimental import pallas as pl
from jax.experimental.pallas import tpu as pltpu


def _rnn_seq_kernel(
    emb_ref,      # VMEM (T, E) f32 : gathered embedding rows for the sequence
    hid0_ref,     # VMEM (1, H) f32 : initial hidden state
    wxh_ref,      # VMEM (E, H) f32 : i2h weight, input columns (transposed)
    whh_ref,      # VMEM (H, H) f32 : i2h weight, hidden columns (transposed)
    wxo_ref,      # VMEM (E, O) f32 : i2o weight, input columns (transposed)
    who_ref,      # VMEM (H, O) f32 : i2o weight, hidden columns (transposed)
    bh_ref,       # VMEM (1, H) f32 : i2h bias
    bo_ref,       # VMEM (1, O) f32 : i2o bias
    logp_ref,     # VMEM (T, O) f32 : log-softmax outputs (one dense store)
    hid_out_ref,  # VMEM (1, H) f32 : final hidden state (single write)
    hprev_ref,    # VMEM (T, H) f32 scratch : hidden consumed by each step
):
    T = emb_ref.shape[0]

    # ---- Phase 0 (batched, off the recurrent chain): input projections ----
    x_h = jnp.dot(emb_ref[...], wxh_ref[...],
                  preferred_element_type=jnp.float32) + bh_ref[...]    # (T, H)
    x_o = jnp.dot(emb_ref[...], wxo_ref[...],
                  preferred_element_type=jnp.float32) + bo_ref[...]    # (T, O)

    # ---- Phase 1 (serial): hidden recurrence only, one small dot per step ----
    w_hh = whh_ref[...]
    h = hid0_ref[...]                                   # (1, H) == h_{-1}
    for t in range(T):                                  # static unroll, T small
        hprev_ref[pl.ds(t, 1), :] = h                   # hidden used by step t
        h = x_h[t:t + 1, :] + jnp.dot(h, w_hh,
                                      preferred_element_type=jnp.float32)

    # ---- Phase 2 (batched): output projection + log-softmax, single stores ----
    logits = x_o + jnp.dot(hprev_ref[...], who_ref[...],
                           preferred_element_type=jnp.float32)         # (T, O)
    m = jnp.max(logits, axis=1, keepdims=True)
    shifted = logits - m
    lse = jnp.log(jnp.sum(jnp.exp(shifted), axis=1, keepdims=True))
    logp_ref[...] = shifted - lse
    hid_out_ref[...] = h                                # final hidden, one write


def rnn_forward(words, hidden0, embedding, w_i2h, b_i2h, w_i2o, b_i2o):
    """Apply the RNN forward() step to every token in `words`.

    words:     (T,) int32 token indices
    hidden0:   (1, H) f32 initial hidden state
    embedding: (V, E) f32
    w_i2h:     (H, E+H) f32   (PyTorch Linear layout: out x in)
    b_i2h:     (H,)     f32
    w_i2o:     (O, E+H) f32
    b_i2o:     (O,)     f32
    returns (log_probs (T, O), final_hidden (1, H))
    """
    V, E = embedding.shape
    H = hidden0.shape[1]
    O = w_i2o.shape[0]
    T = words.shape[0]

    # One-time prep (amortized over all T steps), all off the recurrent chain:
    # embedding lookup done here (nn.Embedding gather), weights split into
    # input-columns / hidden-columns and transposed to (in, out) layout.
    emb_seq = jnp.take(embedding, words.astype(jnp.int32), axis=0)   # (T, E)
    w_xh = w_i2h[:, :E].T            # (E, H)
    w_hh = w_i2h[:, E:].T            # (H, H)
    w_xo = w_i2o[:, :E].T            # (E, O)
    w_ho = w_i2o[:, E:].T            # (H, O)
    b_h = b_i2h.reshape(1, H)
    b_o = b_i2o.reshape(1, O)

    grid_spec = pltpu.PrefetchScalarGridSpec(
        num_scalar_prefetch=0,
        grid=(1,),                                        # single invocation
        in_specs=[
            pl.BlockSpec((T, E), lambda i: (0, 0)),       # emb_seq
            pl.BlockSpec((1, H), lambda i: (0, 0)),       # hidden0
            pl.BlockSpec((E, H), lambda i: (0, 0)),       # w_xh
            pl.BlockSpec((H, H), lambda i: (0, 0)),       # w_hh
            pl.BlockSpec((E, O), lambda i: (0, 0)),       # w_xo
            pl.BlockSpec((H, O), lambda i: (0, 0)),       # w_ho
            pl.BlockSpec((1, H), lambda i: (0, 0)),       # b_h
            pl.BlockSpec((1, O), lambda i: (0, 0)),       # b_o
        ],
        out_specs=(
            pl.BlockSpec((T, O), lambda i: (0, 0)),       # log-probs slab
            pl.BlockSpec((1, H), lambda i: (0, 0)),       # final hidden
        ),
        scratch_shapes=[pltpu.VMEM((T, H), jnp.float32)],
    )

    log_probs, final_hidden = pl.pallas_call(
        _rnn_seq_kernel,
        grid_spec=grid_spec,
        out_shape=(
            jax.ShapeDtypeStruct((T, O), jnp.float32),
            jax.ShapeDtypeStruct((1, H), jnp.float32),
        ),
        compiler_params=pltpu.CompilerParams(
            dimension_semantics=("arbitrary",),
        ),
    )(emb_seq, hidden0, w_xh, w_hh, w_xo, w_ho, b_h, b_o)
    return log_probs, final_hidden


def rnn_step(word, hidden, embedding, w_i2h, b_i2h, w_i2o, b_i2o):
    """Single-step forward(word, hidden) matching the PyTorch signature."""
    lp, h = rnn_forward(
        word.reshape(1), hidden, embedding, w_i2h, b_i2h, w_i2o, b_i2o)
    return lp, h


def _reference(words, hidden0, embedding, w_i2h, b_i2h, w_i2o, b_i2o):
    h = hidden0
    outs = []
    for t in range(words.shape[0]):
        emb = embedding[words[t]].reshape(1, -1)
        combined = jnp.concatenate([emb, h], axis=1)
        new_h = combined @ w_i2h.T + b_i2h
        logits = combined @ w_i2o.T + b_i2o
        outs.append(jax.nn.log_softmax(logits, axis=1))
        h = new_h
    return jnp.concatenate(outs, axis=0), h


if __name__ == "__main__":
    # Sizes implied by the module (batch fixed at 1 by forward()).
    input_size = 16     # E
    hidden_size = 32    # H
    vocab_size = 50     # V
    output_size = 8     # O
    seq_len = 8         # T

    key = jax.random.PRNGKey(0)
    k_emb, k_wh, k_bh, k_wo, k_bo, k_words = jax.random.split(key, 6)

    embedding = jax.random.normal(k_emb, (vocab_size, input_size), jnp.float32)
    w_i2h = jax.random.normal(
        k_wh, (hidden_size, input_size + hidden_size), jnp.float32) * 0.1
    b_i2h = jax.random.normal(k_bh, (hidden_size,), jnp.float32) * 0.1
    w_i2o = jax.random.normal(
        k_wo, (output_size, input_size + hidden_size), jnp.float32) * 0.1
    b_i2o = jax.random.normal(k_bo, (output_size,), jnp.float32) * 0.1

    hidden0 = jnp.zeros((1, hidden_size), jnp.float32)   # init_hidden()
    words = jax.random.randint(k_words, (seq_len,), 0, vocab_size, jnp.int32)

    # Fused whole-sequence kernel.
    log_probs, final_hidden = rnn_forward(
        words, hidden0, embedding, w_i2h, b_i2h, w_i2o, b_i2o)
    jax.block_until_ready((log_probs, final_hidden))

    ref_lp, ref_h = _reference(
        words, hidden0, embedding, w_i2h, b_i2h, w_i2o, b_i2o)

    assert log_probs.shape == (seq_len, output_size)
    assert final_hidden.shape == (1, hidden_size)
    assert jnp.allclose(log_probs, ref_lp, atol=1e-5), "log_probs mismatch"
    assert jnp.allclose(final_hidden, ref_h, atol=1e-5), "hidden mismatch"

    # Single-step parity with the original forward(word, hidden) signature.
    lp1, h1 = rnn_step(
        words[0:1], hidden0, embedding, w_i2h, b_i2h, w_i2o, b_i2o)
    jax.block_until_ready((lp1, h1))
    assert jnp.allclose(lp1, ref_lp[0:1], atol=1e-5), "step log_probs mismatch"

    print("KERNEL_OK")
</pallas_src>

<mosaic_0001>
module attributes {stable_mosaic.version = 11 : i64} {
  func.func @_rnn_seq_kernel(%arg0: i32, %arg1: memref<8x16xf32, #tpu.memory_space<vmem>>, %arg2: memref<1x32xf32, #tpu.memory_space<vmem>>, %arg3: memref<16x32xf32, #tpu.memory_space<vmem>>, %arg4: memref<32x32xf32, #tpu.memory_space<vmem>>, %arg5: memref<16x8xf32, #tpu.memory_space<vmem>>, %arg6: memref<32x8xf32, #tpu.memory_space<vmem>>, %arg7: memref<1x32xf32, #tpu.memory_space<vmem>>, %arg8: memref<1x8xf32, #tpu.memory_space<vmem>>, %arg9: memref<8x8xf32, #tpu.memory_space<vmem>>, %arg10: memref<1x32xf32, #tpu.memory_space<vmem>>, %arg11: memref<8x32xf32, #tpu.memory_space<vmem>>) attributes {dimension_semantics = [#tpu.dimension_semantics<arbitrary>], iteration_bounds = array<i64: 1>, scalar_prefetch = 0 : i64, scratch_operands = 1 : i64, tpu.core_type = #tpu.core_type<tc>, window_params = [{pipeline_mode = #tpu.pipeline_mode<synchronous>, transform_indices = @transform_0, window_bounds = array<i64: 8, 16>}, {pipeline_mode = #tpu.pipeline_mode<synchronous>, transform_indices = @transform_1, window_bounds = array<i64: 1, 32>}, {pipeline_mode = #tpu.pipeline_mode<synchronous>, transform_indices = @transform_2, window_bounds = array<i64: 16, 32>}, {pipeline_mode = #tpu.pipeline_mode<synchronous>, transform_indices = @transform_3, window_bounds = array<i64: 32, 32>}, {pipeline_mode = #tpu.pipeline_mode<synchronous>, transform_indices = @transform_4, window_bounds = array<i64: 16, 8>}, {pipeline_mode = #tpu.pipeline_mode<synchronous>, transform_indices = @transform_5, window_bounds = array<i64: 32, 8>}, {pipeline_mode = #tpu.pipeline_mode<synchronous>, transform_indices = @transform_6, window_bounds = array<i64: 1, 32>}, {pipeline_mode = #tpu.pipeline_mode<synchronous>, transform_indices = @transform_7, window_bounds = array<i64: 1, 8>}, {pipeline_mode = #tpu.pipeline_mode<synchronous>, transform_indices = @transform_8, window_bounds = array<i64: 8, 8>}, {pipeline_mode = #tpu.pipeline_mode<synchronous>, transform_indices = @transform_9, window_bounds = array<i64: 1, 32>}]} {
    %c0 = arith.constant 0 : index
    %c0_0 = arith.constant 0 : index
    %0 = vector.load %arg1[%c0, %c0_0] : memref<8x16xf32, #tpu.memory_space<vmem>>, vector<8x16xf32>
    %c0_1 = arith.constant 0 : index
    %c0_2 = arith.constant 0 : index
    %1 = vector.load %arg3[%c0_1, %c0_2] : memref<16x32xf32, #tpu.memory_space<vmem>>, vector<16x32xf32>
    %cst = arith.constant dense<0.000000e+00> : vector<8x32xf32>
    %2 = tpu.matmul %0, %1, %cst {dimension_numbers = #tpu.dot_dimension_numbers<[1], [0], [0], [1], [0, 0, 1, 1], [], []>} : vector<8x16xf32>, vector<16x32xf32>, vector<8x32xf32> -> vector<8x32xf32>
    %c0_3 = arith.constant 0 : index
    %c0_4 = arith.constant 0 : index
    %3 = vector.load %arg7[%c0_3, %c0_4] : memref<1x32xf32, #tpu.memory_space<vmem>>, vector<1x32xf32>
    %4 = vector.broadcast %3 : vector<1x32xf32> to vector<8x32xf32>
    %5 = arith.addf %2, %4 : vector<8x32xf32>
    %c0_5 = arith.constant 0 : index
    %c0_6 = arith.constant 0 : index
    %6 = vector.load %arg1[%c0_5, %c0_6] : memref<8x16xf32, #tpu.memory_space<vmem>>, vector<8x16xf32>
    %c0_7 = arith.constant 0 : index
    %c0_8 = arith.constant 0 : index
    %7 = vector.load %arg5[%c0_7, %c0_8] : memref<16x8xf32, #tpu.memory_space<vmem>>, vector<16x8xf32>
    %cst_9 = arith.constant dense<0.000000e+00> : vector<8x8xf32>
    %8 = tpu.matmul %6, %7, %cst_9 {dimension_numbers = #tpu.dot_dimension_numbers<[1], [0], [0], [1], [0, 0, 1, 1], [], []>} : vector<8x16xf32>, vector<16x8xf32>, vector<8x8xf32> -> vector<8x8xf32>
    %c0_10 = arith.constant 0 : index
    %c0_11 = arith.constant 0 : index
    %9 = vector.load %arg8[%c0_10, %c0_11] : memref<1x8xf32, #tpu.memory_space<vmem>>, vector<1x8xf32>
    %10 = vector.broadcast %9 : vector<1x8xf32> to vector<8x8xf32>
    %11 = arith.addf %8, %10 : vector<8x8xf32>
    %c0_12 = arith.constant 0 : index
    %c0_13 = arith.constant 0 : index
    %12 = vector.load %arg4[%c0_12, %c0_13] : memref<32x32xf32, #tpu.memory_space<vmem>>, vector<32x32xf32>
    %c0_14 = arith.constant 0 : index
    %c0_15 = arith.constant 0 : index
    %13 = vector.load %arg2[%c0_14, %c0_15] : memref<1x32xf32, #tpu.memory_space<vmem>>, vector<1x32xf32>
    %c0_16 = arith.constant 0 : index
    %c0_17 = arith.constant 0 : index
    %14 = vector.load %arg11[%c0_16, %c0_17] : memref<8x32xf32, #tpu.memory_space<vmem>>, vector<1x32xf32>
    tpu.vector_store %arg11[%c0_16, %c0_17], %13 {strides = array<i32>} : memref<8x32xf32, #tpu.memory_space<vmem>>, vector<1x32xf32>,
    %15 = vector.extract_strided_slice %5 {offsets = [0, 0], sizes = [1, 32], strides = [1, 1]} : vector<8x32xf32> to vector<1x32xf32>
    %cst_18 = arith.constant dense<0.000000e+00> : vector<1x32xf32>
    %16 = tpu.matmul %13, %12, %cst_18 {dimension_numbers = #tpu.dot_dimension_numbers<[1], [0], [0], [1], [0, 0, 1, 1], [], []>} : vector<1x32xf32>, vector<32x32xf32>, vector<1x32xf32> -> vector<1x32xf32>
    %17 = arith.addf %15, %16 : vector<1x32xf32>
    %c1 = arith.constant 1 : index
    %c0_19 = arith.constant 0 : index
    %18 = vector.load %arg11[%c1, %c0_19] : memref<8x32xf32, #tpu.memory_space<vmem>>, vector<1x32xf32>
    tpu.vector_store %arg11[%c1, %c0_19], %17 {strides = array<i32>} : memref<8x32xf32, #tpu.memory_space<vmem>>, vector<1x32xf32>,
    %19 = vector.extract_strided_slice %5 {offsets = [1, 0], sizes = [1, 32], strides = [1, 1]} : vector<8x32xf32> to vector<1x32xf32>
    %cst_20 = arith.constant dense<0.000000e+00> : vector<1x32xf32>
    %20 = tpu.matmul %17, %12, %cst_20 {dimension_numbers = #tpu.dot_dimension_numbers<[1], [0], [0], [1], [0, 0, 1, 1], [], []>} : vector<1x32xf32>, vector<32x32xf32>, vector<1x32xf32> -> vector<1x32xf32>
    %21 = arith.addf %19, %20 : vector<1x32xf32>
    %c2 = arith.constant 2 : index
    %c0_21 = arith.constant 0 : index
    %22 = vector.load %arg11[%c2, %c0_21] : memref<8x32xf32, #tpu.memory_space<vmem>>, vector<1x32xf32>
    tpu.vector_store %arg11[%c2, %c0_21], %21 {strides = array<i32>} : memref<8x32xf32, #tpu.memory_space<vmem>>, vector<1x32xf32>,
    %23 = vector.extract_strided_slice %5 {offsets = [2, 0], sizes = [1, 32], strides = [1, 1]} : vector<8x32xf32> to vector<1x32xf32>
    %cst_22 = arith.constant dense<0.000000e+00> : vector<1x32xf32>
    %24 = tpu.matmul %21, %12, %cst_22 {dimension_numbers = #tpu.dot_dimension_numbers<[1], [0], [0], [1], [0, 0, 1, 1], [], []>} : vector<1x32xf32>, vector<32x32xf32>, vector<1x32xf32> -> vector<1x32xf32>
    %25 = arith.addf %23, %24 : vector<1x32xf32>
    %c3 = arith.constant 3 : index
    %c0_23 = arith.constant 0 : index
    %26 = vector.load %arg11[%c3, %c0_23] : memref<8x32xf32, #tpu.memory_space<vmem>>, vector<1x32xf32>
    tpu.vector_store %arg11[%c3, %c0_23], %25 {strides = array<i32>} : memref<8x32xf32, #tpu.memory_space<vmem>>, vector<1x32xf32>,
    %27 = vector.extract_strided_slice %5 {offsets = [3, 0], sizes = [1, 32], strides = [1, 1]} : vector<8x32xf32> to vector<1x32xf32>
    %cst_24 = arith.constant dense<0.000000e+00> : vector<1x32xf32>
    %28 = tpu.matmul %25, %12, %cst_24 {dimension_numbers = #tpu.dot_dimension_numbers<[1], [0], [0], [1], [0, 0, 1, 1], [], []>} : vector<1x32xf32>, vector<32x32xf32>, vector<1x32xf32> -> vector<1x32xf32>
    %29 = arith.addf %27, %28 : vector<1x32xf32>
    %c4 = arith.constant 4 : index
    %c0_25 = arith.constant 0 : index
    %30 = vector.load %arg11[%c4, %c0_25] : memref<8x32xf32, #tpu.memory_space<vmem>>, vector<1x32xf32>
    tpu.vector_store %arg11[%c4, %c0_25], %29 {strides = array<i32>} : memref<8x32xf32, #tpu.memory_space<vmem>>, vector<1x32xf32>,
    %31 = vector.extract_strided_slice %5 {offsets = [4, 0], sizes = [1, 32], strides = [1, 1]} : vector<8x32xf32> to vector<1x32xf32>
    %cst_26 = arith.constant dense<0.000000e+00> : vector<1x32xf32>
    %32 = tpu.matmul %29, %12, %cst_26 {dimension_numbers = #tpu.dot_dimension_numbers<[1], [0], [0], [1], [0, 0, 1, 1], [], []>} : vector<1x32xf32>, vector<32x32xf32>, vector<1x32xf32> -> vector<1x32xf32>
    %33 = arith.addf %31, %32 : vector<1x32xf32>
    %c5 = arith.constant 5 : index
    %c0_27 = arith.constant 0 : index
    %34 = vector.load %arg11[%c5, %c0_27] : memref<8x32xf32, #tpu.memory_space<vmem>>, vector<1x32xf32>
    tpu.vector_store %arg11[%c5, %c0_27], %33 {strides = array<i32>} : memref<8x32xf32, #tpu.memory_space<vmem>>, vector<1x32xf32>,
    %35 = vector.extract_strided_slice %5 {offsets = [5, 0], sizes = [1, 32], strides = [1, 1]} : vector<8x32xf32> to vector<1x32xf32>
    %cst_28 = arith.constant dense<0.000000e+00> : vector<1x32xf32>
    %36 = tpu.matmul %33, %12, %cst_28 {dimension_numbers = #tpu.dot_dimension_numbers<[1], [0], [0], [1], [0, 0, 1, 1], [], []>} : vector<1x32xf32>, vector<32x32xf32>, vector<1x32xf32> -> vector<1x32xf32>
    %37 = arith.addf %35, %36 : vector<1x32xf32>
    %c6 = arith.constant 6 : index
    %c0_29 = arith.constant 0 : index
    %38 = vector.load %arg11[%c6, %c0_29] : memref<8x32xf32, #tpu.memory_space<vmem>>, vector<1x32xf32>
    tpu.vector_store %arg11[%c6, %c0_29], %37 {strides = array<i32>} : memref<8x32xf32, #tpu.memory_space<vmem>>, vector<1x32xf32>,
    %39 = vector.extract_strided_slice %5 {offsets = [6, 0], sizes = [1, 32], strides = [1, 1]} : vector<8x32xf32> to vector<1x32xf32>
    %cst_30 = arith.constant dense<0.000000e+00> : vector<1x32xf32>
    %40 = tpu.matmul %37, %12, %cst_30 {dimension_numbers = #tpu.dot_dimension_numbers<[1], [0], [0], [1], [0, 0, 1, 1], [], []>} : vector<1x32xf32>, vector<32x32xf32>, vector<1x32xf32> -> vector<1x32xf32>
    %41 = arith.addf %39, %40 : vector<1x32xf32>
    %c7 = arith.constant 7 : index
    %c0_31 = arith.constant 0 : index
    %42 = vector.load %arg11[%c7, %c0_31] : memref<8x32xf32, #tpu.memory_space<vmem>>, vector<1x32xf32>
    tpu.vector_store %arg11[%c7, %c0_31], %41 {strides = array<i32>} : memref<8x32xf32, #tpu.memory_space<vmem>>, vector<1x32xf32>,
    %43 = vector.extract_strided_slice %5 {offsets = [7, 0], sizes = [1, 32], strides = [1, 1]} : vector<8x32xf32> to vector<1x32xf32>
    %cst_32 = arith.constant dense<0.000000e+00> : vector<1x32xf32>
    %44 = tpu.matmul %41, %12, %cst_32 {dimension_numbers = #tpu.dot_dimension_numbers<[1], [0], [0], [1], [0, 0, 1, 1], [], []>} : vector<1x32xf32>, vector<32x32xf32>, vector<1x32xf32> -> vector<1x32xf32>
    %45 = arith.addf %43, %44 : vector<1x32xf32>
    %c0_33 = arith.constant 0 : index
    %c0_34 = arith.constant 0 : index
    %46 = vector.load %arg11[%c0_33, %c0_34] : memref<8x32xf32, #tpu.memory_space<vmem>>, vector<8x32xf32>
    %c0_35 = arith.constant 0 : index
    %c0_36 = arith.constant 0 : index
    %47 = vector.load %arg6[%c0_35, %c0_36] : memref<32x8xf32, #tpu.memory_space<vmem>>, vector<32x8xf32>
    %cst_37 = arith.constant dense<0.000000e+00> : vector<8x8xf32>
    %48 = tpu.matmul %46, %47, %cst_37 {dimension_numbers = #tpu.dot_dimension_numbers<[1], [0], [0], [1], [0, 0, 1, 1], [], []>} : vector<8x32xf32>, vector<32x8xf32>, vector<8x8xf32> -> vector<8x8xf32>
    %49 = arith.addf %11, %48 : vector<8x8xf32>
    %cst_38 = arith.constant dense<0xFF800000> : vector<8xf32>
    %50 = vector.multi_reduction <maximumf>, %49, %cst_38 [1] : vector<8x8xf32> to vector<8xf32>
    %51 = vector.shape_cast %50 : vector<8xf32> to vector<8x1xf32>
    %52 = vector.broadcast %51 : vector<8x1xf32> to vector<8x8xf32>
    %53 = arith.subf %49, %52 : vector<8x8xf32>
    %54 = math.exp %53 : vector<8x8xf32>
    %cst_39 = arith.constant dense<0.000000e+00> : vector<8xf32>
    %55 = vector.multi_reduction <add>, %54, %cst_39 [1] : vector<8x8xf32> to vector<8xf32>
    %56 = vector.shape_cast %55 : vector<8xf32> to vector<8x1xf32>
    %57 = math.log %56 : vector<8x1xf32>
    %58 = vector.broadcast %57 : vector<8x1xf32> to vector<8x8xf32>
    %59 = arith.subf %53, %58 : vector<8x8xf32>
    %c0_40 = arith.constant 0 : index
    %c0_41 = arith.constant 0 : index
    %60 = vector.load %arg9[%c0_40, %c0_41] : memref<8x8xf32, #tpu.memory_space<vmem>>, vector<8x8xf32>
    tpu.vector_store %arg9[%c0_40, %c0_41], %59 {strides = array<i32>} : memref<8x8xf32, #tpu.memory_space<vmem>>, vector<8x8xf32>,
    %c0_42 = arith.constant 0 : index
    %c0_43 = arith.constant 0 : index
    %61 = vector.load %arg10[%c0_42, %c0_43] : memref<1x32xf32, #tpu.memory_space<vmem>>, vector<1x32xf32>
    tpu.vector_store %arg10[%c0_42, %c0_43], %45 {strides = array<i32>} : memref<1x32xf32, #tpu.memory_space<vmem>>, vector<1x32xf32>,
    return
  }
  func.func @transform_0(%arg0: i32) -> (i32, i32) {
    %c0_i32 = arith.constant 0 : i32
    %c0_i32_0 = arith.constant 0 : i32
    %c0_i32_1 = arith.constant 0 : i32
    return %c0_i32, %c0_i32_0 : i32, i32
  }
  func.func @transform_1(%arg0: i32) -> (i32, i32) {
    %c0_i32 = arith.constant 0 : i32
    %c0_i32_0 = arith.constant 0 : i32
    %c0_i32_1 = arith.constant 0 : i32
    return %c0_i32, %c0_i32_0 : i32, i32
  }
  func.func @transform_2(%arg0: i32) -> (i32, i32) {
    %c0_i32 = arith.constant 0 : i32
    %c0_i32_0 = arith.constant 0 : i32
    %c0_i32_1 = arith.constant 0 : i32
    return %c0_i32, %c0_i32_0 : i32, i32
  }
  func.func @transform_3(%arg0: i32) -> (i32, i32) {
    %c0_i32 = arith.constant 0 : i32
    %c0_i32_0 = arith.constant 0 : i32
    %c0_i32_1 = arith.constant 0 : i32
    return %c0_i32, %c0_i32_0 : i32, i32
  }
  func.func @transform_4(%arg0: i32) -> (i32, i32) {
    %c0_i32 = arith.constant 0 : i32
    %c0_i32_0 = arith.constant 0 : i32
    %c0_i32_1 = arith.constant 0 : i32
    return %c0_i32, %c0_i32_0 : i32, i32
  }
  func.func @transform_5(%arg0: i32) -> (i32, i32) {
    %c0_i32 = arith.constant 0 : i32
    %c0_i32_0 = arith.constant 0 : i32
    %c0_i32_1 = arith.constant 0 : i32
    return %c0_i32, %c0_i32_0 : i32, i32
  }
  func.func @transform_6(%arg0: i32) -> (i32, i32) {
    %c0_i32 = arith.constant 0 : i32
    %c0_i32_0 = arith.constant 0 : i32
    %c0_i32_1 = arith.constant 0 : i32
    return %c0_i32, %c0_i32_0 : i32, i32
  }
  func.func @transform_7(%arg0: i32) -> (i32, i32) {
    %c0_i32 = arith.constant 0 : i32
    %c0_i32_0 = arith.constant 0 : i32
    %c0_i32_1 = arith.constant 0 : i32
    return %c0_i32, %c0_i32_0 : i32, i32
  }
  func.func @transform_8(%arg0: i32) -> (i32, i32) {
    %c0_i32 = arith.constant 0 : i32
    %c0_i32_0 = arith.constant 0 : i32
    %c0_i32_1 = arith.constant 0 : i32
    return %c0_i32, %c0_i32_0 : i32, i32
  }
  func.func @transform_9(%arg0: i32) -> (i32, i32) {
    %c0_i32 = arith.constant 0 : i32
    %c0_i32_0 = arith.constant 0 : i32
    %c0_i32_1 = arith.constant 0 : i32
    return %c0_i32, %c0_i32_0 : i32, i32
  }
}

</mosaic_0001>

<llo_original>
// kernel: tpu_custom_call.1
$region0: #{tpu_custom_call.1}
  #allocation0 [shape = 'u32[]', space=smem, size = 0x4, offset = 0x4, fixed_abs, tag = 'smem constant byte address 0x4 - core index']
  #allocation1 [shape = 'u32[72,128]{1,0:T(1,128)}', space=vmem, size = 0x9000, scoped, tag = 'internal scratch']
  #allocation2 [shape = 'f32[8,32]{1,0:T(8,128)}', space=vmem, size = 0x1000, scoped, tag = 'scratch operand']
  %s0 = inlined_call_operand.vmem [shape: f32[8,16], index: 0, kind: input, shape index: {}]
  %s1 = inlined_call_operand.hbm [shape: f32[1,32], index: 1, kind: input, shape index: {}]
  %s2 = inlined_call_operand.vmem [shape: f32[16,32], index: 2, kind: input, shape index: {}]
  %s3 = inlined_call_operand.vmem [shape: f32[32,32], index: 3, kind: input, shape index: {}]
  %s4 = inlined_call_operand.vmem [shape: f32[16,8], index: 4, kind: input, shape index: {}]
  %s5 = inlined_call_operand.vmem [shape: f32[32,8], index: 5, kind: input, shape index: {}]
  %s6 = inlined_call_operand.vmem [shape: f32[1,32], index: 6, kind: input, shape index: {}]
  %s7 = inlined_call_operand.vmem [shape: f32[1,8], index: 7, kind: input, shape index: {}]
  %s8 = inlined_call_operand.hbm [shape: f32[8,8], index: 8, kind: output, shape index: {0}]
  %s9 = inlined_call_operand.hbm [shape: f32[1,32], index: 9, kind: output, shape index: {1}]
  %10 = xla_tuple %s8, %s9
  %s11 = sld [smem:[#allocation0]]
  $region54: #{tpu_custom_call.1} parent=0
    _
  %s13 = ssub.s32 1, %s11
  %s14 = scalar_select 0, %s13, %s11
  $region1: #{tpu_custom_call.1} parent=0
    #allocation3 [shape = 'u8[512]{0}', space=vmem, size = 0x400, scoped, tag = 'input window, operand 1, single buffered']
    #allocation4 [shape = 's32[1]{0}', space=sflag, size = 0x4, scoped, tag = 'scoped memory for tpu_custom_call.1']
    #allocation5 [shape = 's32[1]{0}', space=sflag, size = 0x4, scoped, tag = 'scoped memory for tpu_custom_call.1']
    #allocation6 [shape = 'u8[4096]{0}', space=vmem, size = 0x1000, scoped, tag = 'output window, operand 0, single buffered']
    #allocation7 [shape = 'u8[512]{0}', space=vmem, size = 0x400, scoped, tag = 'output window, operand 1, single buffered']
    #allocation8 [shape = 's32[1]{0}', space=sflag, size = 0x4, scoped, tag = 'scoped memory for tpu_custom_call.1']
    %15 = vsyncpa [#allocation4], 0
    %16 = vsyncpa [#allocation5], 0
    %17 = vsyncpa [#allocation8], 0
    // Predicated region
    $region2: #{tpu_custom_call.1} parent=1 // pred_check
      _
    $region3: #{tpu_custom_call.1} parent=1 // pred_check_branch
      %19 = sbr.rel (0) target = $region5
    $region4: #{tpu_custom_call.1} parent=1 // pred_region
      _
    $region5: #{tpu_custom_call.1} parent=1 // pred_fallthru
      _
    // Predicated region
    $region6: #{tpu_custom_call.1} parent=1 // pred_check
      _
    $region7: #{tpu_custom_call.1} parent=1 // pred_check_branch
      %21 = sbr.rel (0) target = $region9
    $region8: #{tpu_custom_call.1} parent=1 // pred_region
      %23 = vsyncadd [#allocation4], 0
      %s25 = sshll.u32 %s1, 4
      %s26 = int_to_ptr.hbm [resolvable:$true] %s25
      %s27 = sshll.u32 [#allocation3], 4
      %s28 = int_to_ptr.vmem [resolvable:$true] %s27
      %30 = dma.hbm_to_vmem [thread:$0]  %s26, 16, %s28, [#allocation4]
    $region9: #{tpu_custom_call.1} parent=1 // pred_fallthru
      _
    // Predicated region
    $region10: #{tpu_custom_call.1} parent=1 // pred_check
      _
    $region11: #{tpu_custom_call.1} parent=1 // pred_check_branch
      %32 = sbr.rel (0) target = $region13
    $region12: #{tpu_custom_call.1} parent=1 // pred_region
      _
    $region13: #{tpu_custom_call.1} parent=1 // pred_fallthru
      _
    // Predicated region
    $region14: #{tpu_custom_call.1} parent=1 // pred_check
      _
    $region15: #{tpu_custom_call.1} parent=1 // pred_check_branch
      %34 = sbr.rel (0) target = $region17
    $region16: #{tpu_custom_call.1} parent=1 // pred_region
      _
    $region17: #{tpu_custom_call.1} parent=1 // pred_fallthru
      _
    // Predicated region
    $region18: #{tpu_custom_call.1} parent=1 // pred_check
      _
    $region19: #{tpu_custom_call.1} parent=1 // pred_check_branch
      %36 = sbr.rel (0) target = $region21
    $region20: #{tpu_custom_call.1} parent=1 // pred_region
      _
    $region21: #{tpu_custom_call.1} parent=1 // pred_fallthru
      _
    // Predicated region
    $region22: #{tpu_custom_call.1} parent=1 // pred_check
      _
    $region23: #{tpu_custom_call.1} parent=1 // pred_check_branch
      %38 = sbr.rel (0) target = $region25
    $region24: #{tpu_custom_call.1} parent=1 // pred_region
      _
    $region25: #{tpu_custom_call.1} parent=1 // pred_fallthru
      _
    // Predicated region
    $region26: #{tpu_custom_call.1} parent=1 // pred_check
      _
    $region27: #{tpu_custom_call.1} parent=1 // pred_check_branch
      %40 = sbr.rel (0) target = $region29
    $region28: #{tpu_custom_call.1} parent=1 // pred_region
      _
    $region29: #{tpu_custom_call.1} parent=1 // pred_fallthru
      _
    // Predicated region
    $region30: #{tpu_custom_call.1} parent=1 // pred_check
      _
    $region31: #{tpu_custom_call.1} parent=1 // pred_check_branch
      %42 = sbr.rel (0) target = $region33
    $region32: #{tpu_custom_call.1} parent=1 // pred_region
      _
    $region33: #{tpu_custom_call.1} parent=1 // pred_fallthru
      _
    // Predicated region
    $region34: #{tpu_custom_call.1} parent=1 // pred_check
      _
    $region35: #{tpu_custom_call.1} parent=1 // pred_check_branch
      %44 = sbr.rel (0) target = $region37
    $region36: #{tpu_custom_call.1} parent=1 // pred_region
      %46 = dma.done [#allocation4], 16
    $region37: #{tpu_custom_call.1} parent=1 // pred_fallthru
      _
    %v47 = vld [vmem:[%s0] sm:$0xff]
    %v48 = vld [vmem:[%s2] sm:$0xff]
    %v49 = vld [vmem:[%s2 + $0x8] sm:$0xff]
    %v50 = vld [vmem:[%s6] sm:$0x1]
    %v52 = vperm.slane %v50, 0
    %vm54 = vcmask 130048
    %v56 = vsel %vm54, %v47, 0
    %58 = vmatpush.msra.mxu0 0.0
    %59 = vmatpush.msra.mxu0 0.0
    %60 = vmatpush.msra.mxu0 0.0
    %61 = vmatpush.msra.mxu0 0.0
    %62 = vmatpush.msra.mxu0 0.0
    %63 = vmatpush.msra.mxu0 0.0
    %64 = vmatpush.msra.mxu0 0.0
    %65 = vmatpush.msra.mxu0 0.0
    %66 = vmatpush.msra.mxu0 0.0
    %67 = vmatpush.msra.mxu0 0.0
    %68 = vmatpush.msra.mxu0 0.0
    %69 = vmatpush.msra.mxu0 0.0
    %70 = vmatpush.msra.mxu0 0.0
    %71 = vmatpush.msra.mxu0 0.0
    %72 = vmatpush.msra.mxu0 %v49
    %73 = vmatpush.msra.mxu0 %v48
    %74 = vmatmul.f32.gmra.mxu0 %v56
    %v75 = vpop.f32.mrf.mxu0
    %v76 = vadd.f32 %v52, %v75
    %77 = vdwg.mxu0
    %v78 = vld [vmem:[%s4] sm:$0xff]
    %v79 = vld [vmem:[%s4 + $0x8] sm:$0xff]
    %v80 = vld [vmem:[%s7] sm:$0x1]
    %v82 = vperm.slane %v80, 0
    %84 = vmatpush.msra.mxu0 0.0
    %85 = vmatpush.msra.mxu0 0.0
    %86 = vmatpush.msra.mxu0 0.0
    %87 = vmatpush.msra.mxu0 0.0
    %88 = vmatpush.msra.mxu0 0.0
    %89 = vmatpush.msra.mxu0 0.0
    %90 = vmatpush.msra.mxu0 0.0
    %91 = vmatpush.msra.mxu0 0.0
    %92 = vmatpush.msra.mxu0 0.0
    %93 = vmatpush.msra.mxu0 0.0
    %94 = vmatpush.msra.mxu0 0.0
    %95 = vmatpush.msra.mxu0 0.0
    %96 = vmatpush.msra.mxu0 0.0
    %97 = vmatpush.msra.mxu0 0.0
    %98 = vmatpush.msra.mxu0 %v79
    %99 = vmatpush.msra.mxu0 %v78
    %100 = vmatmul.f32.gmra.mxu0 %v56
    %v101 = vpop.f32.mrf.mxu0
    %v102 = vadd.f32 %v82, %v101
    %103 = vdwg.mxu0
    %v104 = vld [vmem:[%s3] sm:$0xff]
    %v105 = vld [vmem:[%s3 + $0x8] sm:$0xff]
    %v106 = vld [vmem:[%s3 + $0x10] sm:$0xff]
    %v107 = vld [vmem:[%s3 + $0x18] sm:$0xff]
    %v108 = vld [vmem:[#allocation3] sm:$0x1]
    %vm109 = vcmask 253952
    %110 = vst.msk [vmem:[#allocation2] sm:$0x1] %vm109, %v108
    %vm111 = vcmask 261120
    %v113 = vsel %vm111, %v108, 0
    %115 = vmatpush.msra.mxu0 0.0
    %116 = vmatpush.msra.mxu0 0.0
    %117 = vmatpush.msra.mxu0 0.0
    %118 = vmatpush.msra.mxu0 0.0
    %119 = vmatpush.msra.mxu0 0.0
    %120 = vmatpush.msra.mxu0 0.0
    %121 = vmatpush.msra.mxu0 0.0
    %122 = vmatpush.msra.mxu0 0.0
    %123 = vmatpush.msra.mxu0 0.0
    %124 = vmatpush.msra.mxu0 0.0
    %125 = vmatpush.msra.mxu0 0.0
    %126 = vmatpush.msra.mxu0 0.0
    %127 = vmatpush.msra.mxu0 %v107
    %128 = vmatpush.msra.mxu0 %v106
    %129 = vmatpush.msra.mxu0 %v105
    %130 = vmatpush.msra.mxu0 %v104
    %131 = vmatmul.f32.gmra.mxu0 %v113
    %v132 = vpop.f32.mrf.mxu0
    %v133 = vadd.f32 0.0, %v132
    %134 = vdwg.mxu0
    %v135 = vadd.f32 %v76, %v133
    %136 = vst.msk [vmem:[#allocation2 + $0x1] sm:$0x1] %vm109, %v135
    %v138 = vsel %vm111, %v135, 0
    %140 = vmatpush.msra.mxu0 0.0
    %141 = vmatpush.msra.mxu0 0.0
    %142 = vmatpush.msra.mxu0 0.0
    %143 = vmatpush.msra.mxu0 0.0
    %144 = vmatpush.msra.mxu0 0.0
    %145 = vmatpush.msra.mxu0 0.0
    %146 = vmatpush.msra.mxu0 0.0
    %147 = vmatpush.msra.mxu0 0.0
    %148 = vmatpush.msra.mxu0 0.0
    %149 = vmatpush.msra.mxu0 0.0
    %150 = vmatpush.msra.mxu0 0.0
    %151 = vmatpush.msra.mxu0 0.0
    %152 = vmatpush.msra.mxu0 %v107
    %153 = vmatpush.msra.mxu0 %v106
    %154 = vmatpush.msra.mxu0 %v105
    %155 = vmatpush.msra.mxu0 %v104
    %156 = vmatmul.f32.gmra.mxu0 %v138
    %v157 = vpop.f32.mrf.mxu0
    %v158 = vadd.f32 0.0, %v157
    %159 = vdwg.mxu0
    %v161 = vrot.slane %v158, 7
    %v163 = vadd.f32 %v76, %v161
    %vm164 = vcmask 254977
    %165 = vst.msk [vmem:[#allocation2 + $0x1] sm:$0x2] %vm164, %v163
    %v167 = vrot.slane %v163, 1
    %v168 = vsel %vm111, %v167, 0
    %170 = vmatpush.msra.mxu0 0.0
    %171 = vmatpush.msra.mxu0 0.0
    %172 = vmatpush.msra.mxu0 0.0
    %173 = vmatpush.msra.mxu0 0.0
    %174 = vmatpush.msra.mxu0 0.0
    %175 = vmatpush.msra.mxu0 0.0
    %176 = vmatpush.msra.mxu0 0.0
    %177 = vmatpush.msra.mxu0 0.0
    %178 = vmatpush.msra.mxu0 0.0
    %179 = vmatpush.msra.mxu0 0.0
    %180 = vmatpush.msra.mxu0 0.0
    %181 = vmatpush.msra.mxu0 0.0
    %182 = vmatpush.msra.mxu0 %v107
    %183 = vmatpush.msra.mxu0 %v106
    %184 = vmatpush.msra.mxu0 %v105
    %185 = vmatpush.msra.mxu0 %v104
    %186 = vmatmul.f32.gmra.mxu0 %v168
    %v187 = vpop.f32.mrf.mxu0
    %v188 = vadd.f32 0.0, %v187
    %189 = vdwg.mxu0
    %v191 = vrot.slane %v188, 6
    %v193 = vadd.f32 %v76, %v191
    %vm194 = vcmask 256002
    %195 = vst.msk [vmem:[#allocation2 + $0x1] sm:$0x4] %vm194, %v193
    %v197 = vrot.slane %v193, 2
    %v198 = vsel %vm111, %v197, 0
    %200 = vmatpush.msra.mxu0 0.0
    %201 = vmatpush.msra.mxu0 0.0
    %202 = vmatpush.msra.mxu0 0.0
    %203 = vmatpush.msra.mxu0 0.0
    %204 = vmatpush.msra.mxu0 0.0
    %205 = vmatpush.msra.mxu0 0.0
    %206 = vmatpush.msra.mxu0 0.0
    %207 = vmatpush.msra.mxu0 0.0
    %208 = vmatpush.msra.mxu0 0.0
    %209 = vmatpush.msra.mxu0 0.0
    %210 = vmatpush.msra.mxu0 0.0
    %211 = vmatpush.msra.mxu0 0.0
    %212 = vmatpush.msra.mxu0 %v107
    %213 = vmatpush.msra.mxu0 %v106
    %214 = vmatpush.msra.mxu0 %v105
    %215 = vmatpush.msra.mxu0 %v104
    %216 = vmatmul.f32.gmra.mxu0 %v198
    %v217 = vpop.f32.mrf.mxu0
    %v218 = vadd.f32 0.0, %v217
    %219 = vdwg.mxu0
    %v221 = vrot.slane %v218, 5
    %v223 = vadd.f32 %v76, %v221
    %vm224 = vcmask 257027
    %225 = vst.msk [vmem:[#allocation2 + $0x1] sm:$0x8] %vm224, %v223
    %v227 = vrot.slane %v223, 3
    %v228 = vsel %vm111, %v227, 0
    %230 = vmatpush.msra.mxu0 0.0
    %231 = vmatpush.msra.mxu0 0.0
    %232 = vmatpush.msra.mxu0 0.0
    %233 = vmatpush.msra.mxu0 0.0
    %234 = vmatpush.msra.mxu0 0.0
    %235 = vmatpush.msra.mxu0 0.0
    %236 = vmatpush.msra.mxu0 0.0
    %237 = vmatpush.msra.mxu0 0.0
    %238 = vmatpush.msra.mxu0 0.0
    %239 = vmatpush.msra.mxu0 0.0
    %240 = vmatpush.msra.mxu0 0.0
    %241 = vmatpush.msra.mxu0 0.0
    %242 = vmatpush.msra.mxu0 %v107
    %243 = vmatpush.msra.mxu0 %v106
    %244 = vmatpush.msra.mxu0 %v105
    %245 = vmatpush.msra.mxu0 %v104
    %246 = vmatmul.f32.gmra.mxu0 %v228
    %v247 = vpop.f32.mrf.mxu0
    %v248 = vadd.f32 0.0, %v247
    %249 = vdwg.mxu0
    %v251 = vrot.slane %v248, 4
    %v253 = vadd.f32 %v76, %v251
    %vm254 = vcmask 258052
    %255 = vst.msk [vmem:[#allocation2 + $0x1] sm:$0x10] %vm254, %v253
    %v257 = vrot.slane %v253, 4
    %v258 = vsel %vm111, %v257, 0
    %260 = vmatpush.msra.mxu0 0.0
    %261 = vmatpush.msra.mxu0 0.0
    %262 = vmatpush.msra.mxu0 0.0
    %263 = vmatpush.msra.mxu0 0.0
    %264 = vmatpush.msra.mxu0 0.0
    %265 = vmatpush.msra.mxu0 0.0
    %266 = vmatpush.msra.mxu0 0.0
    %267 = vmatpush.msra.mxu0 0.0
    %268 = vmatpush.msra.mxu0 0.0
    %269 = vmatpush.msra.mxu0 0.0
    %270 = vmatpush.msra.mxu0 0.0
    %271 = vmatpush.msra.mxu0 0.0
    %272 = vmatpush.msra.mxu0 %v107
    %273 = vmatpush.msra.mxu0 %v106
    %274 = vmatpush.msra.mxu0 %v105
    %275 = vmatpush.msra.mxu0 %v104
    %276 = vmatmul.f32.gmra.mxu0 %v258
    %v277 = vpop.f32.mrf.mxu0
    %v278 = vadd.f32 0.0, %v277
    %279 = vdwg.mxu0
    %v281 = vrot.slane %v278, 3
    %v283 = vadd.f32 %v76, %v281
    %vm284 = vcmask 259077
    %285 = vst.msk [vmem:[#allocation2 + $0x1] sm:$0x20] %vm284, %v283
    %v287 = vrot.slane %v283, 5
    %v288 = vsel %vm111, %v287, 0
    %290 = vmatpush.msra.mxu0 0.0
    %291 = vmatpush.msra.mxu0 0.0
    %292 = vmatpush.msra.mxu0 0.0
    %293 = vmatpush.msra.mxu0 0.0
    %294 = vmatpush.msra.mxu0 0.0
    %295 = vmatpush.msra.mxu0 0.0
    %296 = vmatpush.msra.mxu0 0.0
    %297 = vmatpush.msra.mxu0 0.0
    %298 = vmatpush.msra.mxu0 0.0
    %299 = vmatpush.msra.mxu0 0.0
    %300 = vmatpush.msra.mxu0 0.0
    %301 = vmatpush.msra.mxu0 0.0
    %302 = vmatpush.msra.mxu0 %v107
    %303 = vmatpush.msra.mxu0 %v106
    %304 = vmatpush.msra.mxu0 %v105
    %305 = vmatpush.msra.mxu0 %v104
    %306 = vmatmul.f32.gmra.mxu0 %v288
    %v307 = vpop.f32.mrf.mxu0
    %v308 = vadd.f32 0.0, %v307
    %309 = vdwg.mxu0
    %v311 = vrot.slane %v308, 2
    %v313 = vadd.f32 %v76, %v311
    %vm314 = vcmask 260102
    %315 = vst.msk [vmem:[#allocation2 + $0x1] sm:$0x40] %vm314, %v313
    %v317 = vrot.slane %v313, 6
    %v318 = vsel %vm111, %v317, 0
    %320 = vmatpush.msra.mxu0 0.0
    %321 = vmatpush.msra.mxu0 0.0
    %322 = vmatpush.msra.mxu0 0.0
    %323 = vmatpush.msra.mxu0 0.0
    %324 = vmatpush.msra.mxu0 0.0
    %325 = vmatpush.msra.mxu0 0.0
    %326 = vmatpush.msra.mxu0 0.0
    %327 = vmatpush.msra.mxu0 0.0
    %328 = vmatpush.msra.mxu0 0.0
    %329 = vmatpush.msra.mxu0 0.0
    %330 = vmatpush.msra.mxu0 0.0
    %331 = vmatpush.msra.mxu0 0.0
    %332 = vmatpush.msra.mxu0 %v107
    %333 = vmatpush.msra.mxu0 %v106
    %334 = vmatpush.msra.mxu0 %v105
    %335 = vmatpush.msra.mxu0 %v104
    %336 = vmatmul.f32.gmra.mxu0 %v318
    %v337 = vpop.f32.mrf.mxu0
    %v338 = vadd.f32 0.0, %v337
    %339 = vdwg.mxu0
    %v341 = vrot.slane %v338, 1
    %v343 = vadd.f32 %v76, %v341
    %v344 = vld [vmem:[#allocation2] sm:$0xff]
    %v345 = vld [vmem:[%s5] sm:$0xff]
    %v346 = vld [vmem:[%s5 + $0x8] sm:$0xff]
    %v347 = vld [vmem:[%s5 + $0x10] sm:$0xff]
    %v348 = vld [vmem:[%s5 + $0x18] sm:$0xff]
    %v350 = vsel %vm111, %v344, 0
    %352 = vmatpush.msra.mxu0 0.0
    %353 = vmatpush.msra.mxu0 0.0
    %354 = vmatpush.msra.mxu0 0.0
    %355 = vmatpush.msra.mxu0 0.0
    %356 = vmatpush.msra.mxu0 0.0
    %357 = vmatpush.msra.mxu0 0.0
    %358 = vmatpush.msra.mxu0 0.0
    %359 = vmatpush.msra.mxu0 0.0
    %360 = vmatpush.msra.mxu0 0.0
    %361 = vmatpush.msra.mxu0 0.0
    %362 = vmatpush.msra.mxu0 0.0
    %363 = vmatpush.msra.mxu0 0.0
    %364 = vmatpush.msra.mxu0 %v348
    %365 = vmatpush.msra.mxu0 %v347
    %366 = vmatpush.msra.mxu0 %v346
    %367 = vmatpush.msra.mxu0 %v345
    %368 = vmatmul.f32.gmra.mxu0 %v350
    %v369 = vpop.f32.mrf.mxu0
    %v370 = vadd.f32 0.0, %v369
    %371 = vdwg.mxu0
    %v372 = vadd.f32 %v102, %v370
    %vm373 = vcmask 64512
    %v374 = vsel %vm373, %v372, -inf
    %375 = vmax.xlane.f32.xlu0 %v374
    %v376 = vpop.xlane.xlu0 %375
    %v377 = vsub.f32 %v372, %v376
    %v378 = vmul.f32 %v377, 1.442695
    %v379 = vpow.pop %v378
    %v380 = vsel %vm373, %v379, 0.0
    %381 = vadd.xlane.f32.xlu0 %v380
    %v382 = vpop.xlane.xlu0 %381
    %v383 = vlog2.pop %v382
    %v384 = vmul.f32 %v383, 0.6931472
    %v385 = vsub.f32 %v377, %v384
    %386 = vst.msk [vmem:[#allocation6] sm:$0xff] %vm373, %v385
    %vm387 = vcmask 261127
    %388 = vst.msk [vmem:[#allocation7 - $0x7] sm:$0x80] %vm387, %v343
    // Predicated region
    $region38: #{tpu_custom_call.1} parent=1 // pred_check
      _
    $region39: #{tpu_custom_call.1} parent=1 // pred_check_branch
      %390 = sbr.rel (0) target = $region41
    $region40: #{tpu_custom_call.1} parent=1 // pred_region
      %392 = vsyncadd [#allocation5], 0
      %s394 = sshll.u32 [#allocation6], 4
      %s395 = int_to_ptr.vmem [resolvable:$true] %s394
      %s396 = sshll.u32 %s8, 4
      %s397 = int_to_ptr.hbm [resolvable:$true] %s396
      %399 = dma.vmem_to_hbm [thread:$0]  %s395, 128, %s397, [#allocation5]
    $region41: #{tpu_custom_call.1} parent=1 // pred_fallthru
      _
    // Predicated region
    $region42: #{tpu_custom_call.1} parent=1 // pred_check
      _
    $region43: #{tpu_custom_call.1} parent=1 // pred_check_branch
      %401 = sbr.rel (0) target = $region45
    $region44: #{tpu_custom_call.1} parent=1 // pred_region
      %403 = vsyncadd [#allocation8], 0
      %s405 = sshll.u32 [#allocation7], 4
      %s406 = int_to_ptr.vmem [resolvable:$true] %s405
      %s407 = sshll.u32 %s9, 4
      %s408 = int_to_ptr.hbm [resolvable:$true] %s407
      %410 = dma.vmem_to_hbm [thread:$0]  %s406, 16, %s408, [#allocation8]
    $region45: #{tpu_custom_call.1} parent=1 // pred_fallthru
      _
    // Predicated region
    $region46: #{tpu_custom_call.1} parent=1 // pred_check
      _
    $region47: #{tpu_custom_call.1} parent=1 // pred_check_branch
      %412 = sbr.rel (0) target = $region49
    $region48: #{tpu_custom_call.1} parent=1 // pred_region
      %414 = dma.done [#allocation5], 128
    $region49: #{tpu_custom_call.1} parent=1 // pred_fallthru
      _
    // Predicated region
    $region50: #{tpu_custom_call.1} parent=1 // pred_check
      _
    $region51: #{tpu_custom_call.1} parent=1 // pred_check_branch
      %416 = sbr.rel (0) target = $region53
    $region52: #{tpu_custom_call.1} parent=1 // pred_region
      %418 = dma.done [#allocation8], 16
    $region53: #{tpu_custom_call.1} parent=1 // pred_fallthru
      _
    %419 = vsyncpa [#allocation4], 1
    %420 = vsyncpa [#allocation5], 1
    %421 = vsyncpa [#allocation8], 1

</llo_original>
